<compile_context>
chip_gen: v7x
topology: tpu7x:2x2x1
jax: 0.10.0
libtpu: 0.0.40
codegen_flags: <defaults>
</compile_context>

<pallas_src>
import numpy as np
import jax
import jax.numpy as jnp
from jax import lax
from jax.experimental import pallas as pl
from jax.experimental.pallas import tpu as pltpu


def _round_up(a, b):
    return (a + b - 1) // b * b


# ----------------------------------------------------------------------------
# Kernel 1: batched row gather  x_kept[i] = x[kept[i]]  (pure DMA, exact)
# ----------------------------------------------------------------------------
_GATHER_ROWS_PER_STEP = 8  # rows fetched per grid step


def _gather_rows_kernel(kept_ref, *refs):
    del kept_ref  # only used by the index_maps (scalar prefetch)
    out_ref = refs[-1]
    for g, xg_ref in enumerate(refs[:-1]):      # G gathered rows -> one output block
        out_ref[0, g, :] = xg_ref[0, 0, :]


def gather_rows(x, kept):
    """x: (N, F) f32, kept: (K,) int32 -> (K, F) f32 (exact copy of selected rows)."""
    N, F = x.shape
    K = int(kept.shape[0])
    G = _GATHER_ROWS_PER_STEP
    Kp = _round_up(max(K, 1), G)
    # pad with index 0 (valid row); padded output rows are sliced off below
    kept_pad = jnp.zeros((Kp,), jnp.int32).at[:K].set(kept.astype(jnp.int32))
    x3 = x.reshape(N, 1, F)  # free reshape; block last-two-dims == full dims

    in_specs = [
        pl.BlockSpec((1, 1, F), lambda i, kept, g=g: (kept[i * G + g], 0, 0))
        for g in range(G)
    ]
    out = pl.pallas_call(
        _gather_rows_kernel,
        out_shape=jax.ShapeDtypeStruct((Kp // G, G, F), x.dtype),
        grid_spec=pltpu.PrefetchScalarGridSpec(
            num_scalar_prefetch=1,
            grid=(Kp // G,),
            in_specs=in_specs,
            out_specs=pl.BlockSpec((1, G, F), lambda i, kept: (i, 0, 0)),
        ),
        compiler_params=pltpu.CompilerParams(dimension_semantics=("arbitrary",)),
    )(kept_pad, *([x3] * G))
    return out.reshape(Kp, F)[:K]


# ----------------------------------------------------------------------------
# Kernel 2: kept-node adjacency (self loops already appended to the edge list)
#   A[i,e] = (kept[i] == src[e]),  B[j,e] = (kept[j] == dst[e])
#   counts = A @ B^T ;  adj = counts > 0
# ----------------------------------------------------------------------------
def _adj_kernel(kept_i_ref, kept_j_ref, edges_ref, adj_ref, acc_ref):
    # program_id / num_programs only at the top level of the kernel body
    # (never inside pl.when bodies -- that pattern failed to lower previously).
    e = pl.program_id(2)
    n_e = pl.num_programs(2)

    @pl.when(e == 0)
    def _init():
        acc_ref[...] = jnp.zeros_like(acc_ref)

    ki = kept_i_ref[...]                        # (TK, 1) int32 (padded rows = -1)
    kj = kept_j_ref[...]                        # (TK, 1) int32
    src = edges_ref[0:1, :]                     # (1, TE) int32 (padded edges = -2)
    dst = edges_ref[1:2, :]                     # (1, TE) int32

    # bf16 one-hots: 0/1 are exact in bf16 and bf16 is native on every MXU generation.
    # (int8 + int32 acc is a further win on v5e/v6e once MXU-bound; v7x has no int MXU.)
    a = (ki == src).astype(jnp.bfloat16)        # (TK, TE)
    b = (kj == dst).astype(jnp.bfloat16)        # (TK, TE)

    # f32 accumulation: exact while per-(i,j) edge multiplicity < 2^24.
    acc_ref[...] += lax.dot_general(a, b, (((1,), (1,)), ((), ())),
                                    preferred_element_type=jnp.float32)

    @pl.when(e == n_e - 1)
    def _fin():
        adj_ref[...] = (acc_ref[...] > 0.0).astype(adj_ref.dtype)


def subgraph_forward(x, edge_index, idx_nondrop):
    """x: (N,F) f32, edge_index: (2,E) int32, idx_nondrop: (K,) int32 (selection order)."""
    N, F = x.shape
    E = int(edge_index.shape[1])
    K = int(idx_nondrop.shape[0])

    # ---- node feature gather (kernel 1) ----
    x_kept = gather_rows(x.astype(jnp.float32), idx_nondrop.astype(jnp.int32))

    # ---- kept-node adjacency (kernel 2) ----
    # self loops adj[n,n]=1 become extra edges (n,n); exact equivalent after restriction.
    loops = jnp.arange(N, dtype=jnp.int32)
    src_all = jnp.concatenate([edge_index[0].astype(jnp.int32), loops])
    dst_all = jnp.concatenate([edge_index[1].astype(jnp.int32), loops])
    E_tot = E + N

    TK = 256 if K > 128 else 128               # fill the 256-wide MXU on v6e/v7x when K allows
    K_pad = _round_up(max(K, 1), TK)
    TE = min(2048, _round_up(max(E_tot, 1), 128))   # large edge (reduction) tile
    E_pad = _round_up(E_tot, TE)

    # sentinels: padded kept rows = -1, padded edges = -2 -> never match anything
    kept_col = jnp.full((K_pad, 1), -1, jnp.int32).at[:K, 0].set(
        idx_nondrop.astype(jnp.int32))
    edges = jnp.full((2, E_pad), -2, jnp.int32)
    edges = edges.at[0, :E_tot].set(src_all).at[1, :E_tot].set(dst_all)

    adj_pad = pl.pallas_call(
        _adj_kernel,
        out_shape=jax.ShapeDtypeStruct((K_pad, K_pad), jnp.int8),
        grid_spec=pltpu.PrefetchScalarGridSpec(
            num_scalar_prefetch=0,
            grid=(K_pad // TK, K_pad // TK, E_pad // TE),
            in_specs=[
                pl.BlockSpec((TK, 1), lambda i, j, e: (i, 0)),   # kept rows (src side)
                pl.BlockSpec((TK, 1), lambda i, j, e: (j, 0)),   # kept cols (dst side)
                pl.BlockSpec((2, TE), lambda i, j, e: (0, e)),   # packed src/dst edge block
            ],
            out_specs=pl.BlockSpec((TK, TK), lambda i, j, e: (i, j)),
            scratch_shapes=[pltpu.VMEM((TK, TK), jnp.float32)],
        ),
        compiler_params=pltpu.CompilerParams(
            dimension_semantics=("parallel", "parallel", "arbitrary")),
    )(kept_col, kept_col, edges)

    adj_kept = adj_pad[:K, :K]

    # TODO(synk): torch's adj.nonzero().t() has a data-dependent output length; no clean
    # static-shape Pallas equivalent, so return a padded edge list + valid count as glue.
    max_edges = K * K
    num_edges = jnp.sum(adj_kept.astype(jnp.int32))
    rows, cols = jnp.nonzero(adj_kept, size=max_edges, fill_value=-1)
    new_edge_index = jnp.stack([rows, cols]).astype(jnp.int32)       # (2, K*K), -1 padded

    return x_kept, new_edge_index, num_edges, adj_kept


# ----------------------------------------------------------------------------
# Host glue: the module's sequential neighbor-sampling node selection (NumPy RNG).
# ----------------------------------------------------------------------------
def select_subgraph_nodes(edge_index_np, node_num, aug_size, rng):
    if aug_size == 0:
        return np.arange(node_num, dtype=np.int32)
    sub_num = max(int(node_num * aug_size), 2)
    idx_sub = [int(rng.integers(node_num))]
    idx_neigh = set(int(n) for n in edge_index_np[1][edge_index_np[0] == idx_sub[0]])
    count = 0
    while len(idx_sub) <= sub_num:
        count += 1
        if count > node_num:
            break
        if len(idx_neigh) == 0:
            break
        sample_node = int(rng.choice(sorted(idx_neigh)))
        if sample_node in idx_sub:
            continue
        idx_sub.append(sample_node)
        # NOTE: original module calls set.union without assignment (no-op); reproduced.
        idx_neigh.union(set(int(n) for n in edge_index_np[1][edge_index_np[0] == idx_sub[-1]]))
    return np.array(idx_sub, dtype=np.int32)


def numpy_reference(x, edge_index, idx_nondrop):
    x = np.asarray(x)
    ei = np.asarray(edge_index)
    keep = np.asarray(idx_nondrop)
    N = x.shape[0]
    adj = np.zeros((N, N), dtype=np.int32)
    adj[ei[0], ei[1]] = 1
    adj[np.arange(N), np.arange(N)] = 1
    adj_kept = adj[keep, :][:, keep]
    return x[keep], adj_kept


if __name__ == "__main__":
    # Deterministic synthetic graph (the module's "graphs" list entry).
    N, F, E = 16, 32, 64
    aug_size = 0.25

    key = jax.random.PRNGKey(0)
    kx, ke = jax.random.split(key, 2)
    x = jax.random.normal(kx, (N, F), dtype=jnp.float32)
    edge_index = jax.random.randint(ke, (2, E), 0, N, dtype=jnp.int32)
    y = jnp.int32(1)  # graph label, passed through untouched

    # Subgraph node selection (host glue, deterministic).
    rng = np.random.default_rng(0)
    idx_nondrop_np = select_subgraph_nodes(np.asarray(edge_index), N, aug_size, rng)
    idx_nondrop = jnp.asarray(idx_nondrop_np, dtype=jnp.int32)

    x_kept, new_edge_index, num_edges, adj_kept = subgraph_forward(
        x, edge_index, idx_nondrop)
    jax.block_until_ready((x_kept, new_edge_index, num_edges, adj_kept))

    # Verify against a pure-numpy reference of the module's subgraph restriction.
    x_ref, adj_ref = numpy_reference(x, edge_index, idx_nondrop_np)
    np.testing.assert_array_equal(np.asarray(x_kept), x_ref)          # DMA gather is exact
    np.testing.assert_array_equal(np.asarray(adj_kept).astype(np.int32), adj_ref)

    ref_rows, ref_cols = np.nonzero(adj_ref)
    n_valid = int(num_edges)
    assert n_valid == ref_rows.shape[0]
    np.testing.assert_array_equal(np.asarray(new_edge_index[0, :n_valid]), ref_rows)
    np.testing.assert_array_equal(np.asarray(new_edge_index[1, :n_valid]), ref_cols)

    print("KERNEL_OK")
</pallas_src>

<mosaic_0001>
module attributes {stable_mosaic.version = 11 : i64} {
  func.func @_gather_rows_kernel(%arg0: i32, %arg1: memref<8xi32, #tpu.memory_space<smem>>, %arg2: memref<1x1x32xf32, #tpu.memory_space<vmem>>, %arg3: memref<1x1x32xf32, #tpu.memory_space<vmem>>, %arg4: memref<1x1x32xf32, #tpu.memory_space<vmem>>, %arg5: memref<1x1x32xf32, #tpu.memory_space<vmem>>, %arg6: memref<1x1x32xf32, #tpu.memory_space<vmem>>, %arg7: memref<1x1x32xf32, #tpu.memory_space<vmem>>, %arg8: memref<1x1x32xf32, #tpu.memory_space<vmem>>, %arg9: memref<1x1x32xf32, #tpu.memory_space<vmem>>, %arg10: memref<1x8x32xf32, #tpu.memory_space<vmem>>) attributes {dimension_semantics = [#tpu.dimension_semantics<arbitrary>], iteration_bounds = array<i64: 1>, scalar_prefetch = 1 : i64, scratch_operands = 0 : i64, tpu.core_type = #tpu.core_type<tc>, window_params = [{transform_indices = @transform_0, window_bounds = array<i64: 1, 1, 32>}, {transform_indices = @transform_1, window_bounds = array<i64: 1, 1, 32>}, {transform_indices = @transform_2, window_bounds = array<i64: 1, 1, 32>}, {transform_indices = @transform_3, window_bounds = array<i64: 1, 1, 32>}, {transform_indices = @transform_4, window_bounds = array<i64: 1, 1, 32>}, {transform_indices = @transform_5, window_bounds = array<i64: 1, 1, 32>}, {transform_indices = @transform_6, window_bounds = array<i64: 1, 1, 32>}, {transform_indices = @transform_7, window_bounds = array<i64: 1, 1, 32>}, {transform_indices = @transform_8, window_bounds = array<i64: 1, 8, 32>}]} {
    %c0 = arith.constant 0 : index
    %c0_0 = arith.constant 0 : index
    %c0_1 = arith.constant 0 : index
    %0 = vector.load %arg2[%c0, %c0_0, %c0_1] : memref<1x1x32xf32, #tpu.memory_space<vmem>>, vector<1x1x32xf32>
    %1 = vector.shape_cast %0 : vector<1x1x32xf32> to vector<32xf32>
    %c0_2 = arith.constant 0 : index
    %c0_3 = arith.constant 0 : index
    %c0_4 = arith.constant 0 : index
    %2 = vector.load %arg10[%c0_2, %c0_3, %c0_4] : memref<1x8x32xf32, #tpu.memory_space<vmem>>, vector<1x1x32xf32>
    %3 = vector.shape_cast %2 : vector<1x1x32xf32> to vector<32xf32>
    %4 = vector.shape_cast %1 : vector<32xf32> to vector<1x1x32xf32>
    tpu.vector_store %arg10[%c0_2, %c0_3, %c0_4], %4 {strides = array<i32>} : memref<1x8x32xf32, #tpu.memory_space<vmem>>, vector<1x1x32xf32>,
    %c0_5 = arith.constant 0 : index
    %c0_6 = arith.constant 0 : index
    %c0_7 = arith.constant 0 : index
    %5 = vector.load %arg3[%c0_5, %c0_6, %c0_7] : memref<1x1x32xf32, #tpu.memory_space<vmem>>, vector<1x1x32xf32>
    %6 = vector.shape_cast %5 : vector<1x1x32xf32> to vector<32xf32>
    %c0_8 = arith.constant 0 : index
    %c1 = arith.constant 1 : index
    %c0_9 = arith.constant 0 : index
    %7 = vector.load %arg10[%c0_8, %c1, %c0_9] : memref<1x8x32xf32, #tpu.memory_space<vmem>>, vector<1x1x32xf32>
    %8 = vector.shape_cast %7 : vector<1x1x32xf32> to vector<32xf32>
    %9 = vector.shape_cast %6 : vector<32xf32> to vector<1x1x32xf32>
    tpu.vector_store %arg10[%c0_8, %c1, %c0_9], %9 {strides = array<i32>} : memref<1x8x32xf32, #tpu.memory_space<vmem>>, vector<1x1x32xf32>,
    %c0_10 = arith.constant 0 : index
    %c0_11 = arith.constant 0 : index
    %c0_12 = arith.constant 0 : index
    %10 = vector.load %arg4[%c0_10, %c0_11, %c0_12] : memref<1x1x32xf32, #tpu.memory_space<vmem>>, vector<1x1x32xf32>
    %11 = vector.shape_cast %10 : vector<1x1x32xf32> to vector<32xf32>
    %c0_13 = arith.constant 0 : index
    %c2 = arith.constant 2 : index
    %c0_14 = arith.constant 0 : index
    %12 = vector.load %arg10[%c0_13, %c2, %c0_14] : memref<1x8x32xf32, #tpu.memory_space<vmem>>, vector<1x1x32xf32>
    %13 = vector.shape_cast %12 : vector<1x1x32xf32> to vector<32xf32>
    %14 = vector.shape_cast %11 : vector<32xf32> to vector<1x1x32xf32>
    tpu.vector_store %arg10[%c0_13, %c2, %c0_14], %14 {strides = array<i32>} : memref<1x8x32xf32, #tpu.memory_space<vmem>>, vector<1x1x32xf32>,
    %c0_15 = arith.constant 0 : index
    %c0_16 = arith.constant 0 : index
    %c0_17 = arith.constant 0 : index
    %15 = vector.load %arg5[%c0_15, %c0_16, %c0_17] : memref<1x1x32xf32, #tpu.memory_space<vmem>>, vector<1x1x32xf32>
    %16 = vector.shape_cast %15 : vector<1x1x32xf32> to vector<32xf32>
    %c0_18 = arith.constant 0 : index
    %c3 = arith.constant 3 : index
    %c0_19 = arith.constant 0 : index
    %17 = vector.load %arg10[%c0_18, %c3, %c0_19] : memref<1x8x32xf32, #tpu.memory_space<vmem>>, vector<1x1x32xf32>
    %18 = vector.shape_cast %17 : vector<1x1x32xf32> to vector<32xf32>
    %19 = vector.shape_cast %16 : vector<32xf32> to vector<1x1x32xf32>
    tpu.vector_store %arg10[%c0_18, %c3, %c0_19], %19 {strides = array<i32>} : memref<1x8x32xf32, #tpu.memory_space<vmem>>, vector<1x1x32xf32>,
    %c0_20 = arith.constant 0 : index
    %c0_21 = arith.constant 0 : index
    %c0_22 = arith.constant 0 : index
    %20 = vector.load %arg6[%c0_20, %c0_21, %c0_22] : memref<1x1x32xf32, #tpu.memory_space<vmem>>, vector<1x1x32xf32>
    %21 = vector.shape_cast %20 : vector<1x1x32xf32> to vector<32xf32>
    %c0_23 = arith.constant 0 : index
    %c4 = arith.constant 4 : index
    %c0_24 = arith.constant 0 : index
    %22 = vector.load %arg10[%c0_23, %c4, %c0_24] : memref<1x8x32xf32, #tpu.memory_space<vmem>>, vector<1x1x32xf32>
    %23 = vector.shape_cast %22 : vector<1x1x32xf32> to vector<32xf32>
    %24 = vector.shape_cast %21 : vector<32xf32> to vector<1x1x32xf32>
    tpu.vector_store %arg10[%c0_23, %c4, %c0_24], %24 {strides = array<i32>} : memref<1x8x32xf32, #tpu.memory_space<vmem>>, vector<1x1x32xf32>,
    %c0_25 = arith.constant 0 : index
    %c0_26 = arith.constant 0 : index
    %c0_27 = arith.constant 0 : index
    %25 = vector.load %arg7[%c0_25, %c0_26, %c0_27] : memref<1x1x32xf32, #tpu.memory_space<vmem>>, vector<1x1x32xf32>
    %26 = vector.shape_cast %25 : vector<1x1x32xf32> to vector<32xf32>
    %c0_28 = arith.constant 0 : index
    %c5 = arith.constant 5 : index
    %c0_29 = arith.constant 0 : index
    %27 = vector.load %arg10[%c0_28, %c5, %c0_29] : memref<1x8x32xf32, #tpu.memory_space<vmem>>, vector<1x1x32xf32>
    %28 = vector.shape_cast %27 : vector<1x1x32xf32> to vector<32xf32>
    %29 = vector.shape_cast %26 : vector<32xf32> to vector<1x1x32xf32>
    tpu.vector_store %arg10[%c0_28, %c5, %c0_29], %29 {strides = array<i32>} : memref<1x8x32xf32, #tpu.memory_space<vmem>>, vector<1x1x32xf32>,
    %c0_30 = arith.constant 0 : index
    %c0_31 = arith.constant 0 : index
    %c0_32 = arith.constant 0 : index
    %30 = vector.load %arg8[%c0_30, %c0_31, %c0_32] : memref<1x1x32xf32, #tpu.memory_space<vmem>>, vector<1x1x32xf32>
    %31 = vector.shape_cast %30 : vector<1x1x32xf32> to vector<32xf32>
    %c0_33 = arith.constant 0 : index
    %c6 = arith.constant 6 : index
    %c0_34 = arith.constant 0 : index
    %32 = vector.load %arg10[%c0_33, %c6, %c0_34] : memref<1x8x32xf32, #tpu.memory_space<vmem>>, vector<1x1x32xf32>
    %33 = vector.shape_cast %32 : vector<1x1x32xf32> to vector<32xf32>
    %34 = vector.shape_cast %31 : vector<32xf32> to vector<1x1x32xf32>
    tpu.vector_store %arg10[%c0_33, %c6, %c0_34], %34 {strides = array<i32>} : memref<1x8x32xf32, #tpu.memory_space<vmem>>, vector<1x1x32xf32>,
    %c0_35 = arith.constant 0 : index
    %c0_36 = arith.constant 0 : index
    %c0_37 = arith.constant 0 : index
    %35 = vector.load %arg9[%c0_35, %c0_36, %c0_37] : memref<1x1x32xf32, #tpu.memory_space<vmem>>, vector<1x1x32xf32>
    %36 = vector.shape_cast %35 : vector<1x1x32xf32> to vector<32xf32>
    %c0_38 = arith.constant 0 : index
    %c7 = arith.constant 7 : index
    %c0_39 = arith.constant 0 : index
    %37 = vector.load %arg10[%c0_38, %c7, %c0_39] : memref<1x8x32xf32, #tpu.memory_space<vmem>>, vector<1x1x32xf32>
    %38 = vector.shape_cast %37 : vector<1x1x32xf32> to vector<32xf32>
    %39 = vector.shape_cast %36 : vector<32xf32> to vector<1x1x32xf32>
    tpu.vector_store %arg10[%c0_38, %c7, %c0_39], %39 {strides = array<i32>} : memref<1x8x32xf32, #tpu.memory_space<vmem>>, vector<1x1x32xf32>,
    return
  }
  func.func @transform_0(%arg0: i32, %arg1: memref<8xi32, #tpu.memory_space<smem>>) -> (i32, i32, i32) {
    %c8_i32 = arith.constant 8 : i32
    %0 = arith.muli %arg0, %c8_i32 : i32
    %c0_i32 = arith.constant 0 : i32
    %1 = arith.addi %0, %c0_i32 : i32
    %2 = arith.index_cast %1 : i32 to index
    %3 = memref.load %arg1[%2] : memref<8xi32, #tpu.memory_space<smem>>
    %c0_i32_0 = arith.constant 0 : i32
    %c0_i32_1 = arith.constant 0 : i32
    %c0_i32_2 = arith.constant 0 : i32
    return %3, %c0_i32_0, %c0_i32_1 : i32, i32, i32
  }
  func.func @transform_1(%arg0: i32, %arg1: memref<8xi32, #tpu.memory_space<smem>>) -> (i32, i32, i32) {
    %c8_i32 = arith.constant 8 : i32
    %0 = arith.muli %arg0, %c8_i32 : i32
    %c1_i32 = arith.constant 1 : i32
    %1 = arith.addi %0, %c1_i32 : i32
    %2 = arith.index_cast %1 : i32 to index
    %3 = memref.load %arg1[%2] : memref<8xi32, #tpu.memory_space<smem>>
    %c0_i32 = arith.constant 0 : i32
    %c0_i32_0 = arith.constant 0 : i32
    %c0_i32_1 = arith.constant 0 : i32
    return %3, %c0_i32, %c0_i32_0 : i32, i32, i32
  }
  func.func @transform_2(%arg0: i32, %arg1: memref<8xi32, #tpu.memory_space<smem>>) -> (i32, i32, i32) {
    %c8_i32 = arith.constant 8 : i32
    %0 = arith.muli %arg0, %c8_i32 : i32
    %c2_i32 = arith.constant 2 : i32
    %1 = arith.addi %0, %c2_i32 : i32
    %2 = arith.index_cast %1 : i32 to index
    %3 = memref.load %arg1[%2] : memref<8xi32, #tpu.memory_space<smem>>
    %c0_i32 = arith.constant 0 : i32
    %c0_i32_0 = arith.constant 0 : i32
    %c0_i32_1 = arith.constant 0 : i32
    return %3, %c0_i32, %c0_i32_0 : i32, i32, i32
  }
  func.func @transform_3(%arg0: i32, %arg1: memref<8xi32, #tpu.memory_space<smem>>) -> (i32, i32, i32) {
    %c8_i32 = arith.constant 8 : i32
    %0 = arith.muli %arg0, %c8_i32 : i32
    %c3_i32 = arith.constant 3 : i32
    %1 = arith.addi %0, %c3_i32 : i32
    %2 = arith.index_cast %1 : i32 to index
    %3 = memref.load %arg1[%2] : memref<8xi32, #tpu.memory_space<smem>>
    %c0_i32 = arith.constant 0 : i32
    %c0_i32_0 = arith.constant 0 : i32
    %c0_i32_1 = arith.constant 0 : i32
    return %3, %c0_i32, %c0_i32_0 : i32, i32, i32
  }
  func.func @transform_4(%arg0: i32, %arg1: memref<8xi32, #tpu.memory_space<smem>>) -> (i32, i32, i32) {
    %c8_i32 = arith.constant 8 : i32
    %0 = arith.muli %arg0, %c8_i32 : i32
    %c4_i32 = arith.constant 4 : i32
    %1 = arith.addi %0, %c4_i32 : i32
    %2 = arith.index_cast %1 : i32 to index
    %3 = memref.load %arg1[%2] : memref<8xi32, #tpu.memory_space<smem>>
    %c0_i32 = arith.constant 0 : i32
    %c0_i32_0 = arith.constant 0 : i32
    %c0_i32_1 = arith.constant 0 : i32
    return %3, %c0_i32, %c0_i32_0 : i32, i32, i32
  }
  func.func @transform_5(%arg0: i32, %arg1: memref<8xi32, #tpu.memory_space<smem>>) -> (i32, i32, i32) {
    %c8_i32 = arith.constant 8 : i32
    %0 = arith.muli %arg0, %c8_i32 : i32
    %c5_i32 = arith.constant 5 : i32
    %1 = arith.addi %0, %c5_i32 : i32
    %2 = arith.index_cast %1 : i32 to index
    %3 = memref.load %arg1[%2] : memref<8xi32, #tpu.memory_space<smem>>
    %c0_i32 = arith.constant 0 : i32
    %c0_i32_0 = arith.constant 0 : i32
    %c0_i32_1 = arith.constant 0 : i32
    return %3, %c0_i32, %c0_i32_0 : i32, i32, i32
  }
  func.func @transform_6(%arg0: i32, %arg1: memref<8xi32, #tpu.memory_space<smem>>) -> (i32, i32, i32) {
    %c8_i32 = arith.constant 8 : i32
    %0 = arith.muli %arg0, %c8_i32 : i32
    %c6_i32 = arith.constant 6 : i32
    %1 = arith.addi %0, %c6_i32 : i32
    %2 = arith.index_cast %1 : i32 to index
    %3 = memref.load %arg1[%2] : memref<8xi32, #tpu.memory_space<smem>>
    %c0_i32 = arith.constant 0 : i32
    %c0_i32_0 = arith.constant 0 : i32
    %c0_i32_1 = arith.constant 0 : i32
    return %3, %c0_i32, %c0_i32_0 : i32, i32, i32
  }
  func.func @transform_7(%arg0: i32, %arg1: memref<8xi32, #tpu.memory_space<smem>>) -> (i32, i32, i32) {
    %c8_i32 = arith.constant 8 : i32
    %0 = arith.muli %arg0, %c8_i32 : i32
    %c7_i32 = arith.constant 7 : i32
    %1 = arith.addi %0, %c7_i32 : i32
    %2 = arith.index_cast %1 : i32 to index
    %3 = memref.load %arg1[%2] : memref<8xi32, #tpu.memory_space<smem>>
    %c0_i32 = arith.constant 0 : i32
    %c0_i32_0 = arith.constant 0 : i32
    %c0_i32_1 = arith.constant 0 : i32
    return %3, %c0_i32, %c0_i32_0 : i32, i32, i32
  }
  func.func @transform_8(%arg0: i32, %arg1: memref<8xi32, #tpu.memory_space<smem>>) -> (i32, i32, i32) {
    %c0_i32 = arith.constant 0 : i32
    %c0_i32_0 = arith.constant 0 : i32
    %c0_i32_1 = arith.constant 0 : i32
    return %arg0, %c0_i32, %c0_i32_0 : i32, i32, i32
  }
}

</mosaic_0001>

<llo_original>
// kernel: tpu_custom_call.1
$region0: #{tpu_custom_call.1}
  #allocation0 [shape = 'u32[]', space=smem, size = 0x4, offset = 0x4, fixed_abs, tag = 'smem constant byte address 0x4 - core index']
  #allocation1 [shape = 'u32[144,128]{1,0:T(1,128)}', space=vmem, size = 0x12000, scoped, tag = 'internal scratch']
  #allocation2 [shape = 's32[1]{0}', space=sflag, size = 0x4, scoped, tag = 'scoped memory for tpu_custom_call.1']
  #allocation3 [shape = 'u8[512]{0}', space=smem, size = 0x200, scoped, tag = 'prefetched SMEM operand 0']
  %s0 = inlined_call_operand.hbm [shape: s32[8], index: 0, kind: input, shape index: {}]
  %s1 = inlined_call_operand.hbm [shape: f32[16,1,32], index: 1, kind: input, shape index: {}]
  %s2 = inlined_call_operand.hbm [shape: f32[16,1,32], index: 2, kind: input, shape index: {}]
  %s3 = inlined_call_operand.hbm [shape: f32[16,1,32], index: 3, kind: input, shape index: {}]
  %s4 = inlined_call_operand.hbm [shape: f32[16,1,32], index: 4, kind: input, shape index: {}]
  %s5 = inlined_call_operand.vmem [shape: f32[16,1,32], index: 5, kind: input, shape index: {}]
  %s6 = inlined_call_operand.hbm [shape: f32[16,1,32], index: 6, kind: input, shape index: {}]
  %s7 = inlined_call_operand.hbm [shape: f32[16,1,32], index: 7, kind: input, shape index: {}]
  %s8 = inlined_call_operand.hbm [shape: f32[16,1,32], index: 8, kind: input, shape index: {}]
  %s9 = inlined_call_operand.hbm [shape: f32[1,8,32], index: 9, kind: output, shape index: {}]
  %s10 = sld [smem:[#allocation0]]
  $region70: #{tpu_custom_call.1} parent=0
    _
  %s12 = ssub.s32 1, %s10
  %s13 = scalar_select 0, %s12, %s10
  %15 = dma.hbm_to_smem %s0, 16, [#allocation3], [#allocation2]
  %16 = dma.done [#allocation2], 16
  %17 = sfence
  $region1: #{tpu_custom_call.1} parent=0
    #allocation4 [shape = 'u8[512]{0}', space=vmem, size = 0x400, scoped, tag = 'input window, operand 1, single buffered']
    #allocation5 [shape = 's32[1]{0}', space=sflag, size = 0x4, scoped, tag = 'scoped memory for tpu_custom_call.1']
    #allocation6 [shape = 's32[1]{0}', space=sflag, size = 0x4, scoped, tag = 'scoped memory for tpu_custom_call.1']
    #allocation7 [shape = 'u8[512]{0}', space=vmem, size = 0x400, scoped, tag = 'input window, operand 2, single buffered']
    #allocation8 [shape = 's32[1]{0}', space=sflag, size = 0x4, scoped, tag = 'scoped memory for tpu_custom_call.1']
    #allocation9 [shape = 'u8[512]{0}', space=vmem, size = 0x400, scoped, tag = 'input window, operand 3, single buffered']
    #allocation10 [shape = 'u8[512]{0}', space=vmem, size = 0x400, scoped, tag = 'input window, operand 4, single buffered']
    #allocation11 [shape = 's32[1]{0}', space=sflag, size = 0x4, scoped, tag = 'scoped memory for tpu_custom_call.1']
    #allocation12 [shape = 'u8[512]{0}', space=vmem, size = 0x400, scoped, tag = 'input window, operand 6, single buffered']
    #allocation13 [shape = 'u8[512]{0}', space=vmem, size = 0x400, scoped, tag = 'input window, operand 7, single buffered']
    #allocation14 [shape = 's32[1]{0}', space=sflag, size = 0x4, scoped, tag = 'scoped memory for tpu_custom_call.1']
    #allocation15 [shape = 'u8[512]{0}', space=vmem, size = 0x400, scoped, tag = 'input window, operand 8, single buffered']
    #allocation16 [shape = 'u8[4096]{0}', space=vmem, size = 0x1000, scoped, tag = 'output window, operand 0, single buffered']
    %18 = vsyncpa [#allocation5], 0
    %19 = vsyncpa [#allocation8], 0
    %20 = vsyncpa [#allocation11], 0
    %21 = vsyncpa [#allocation14], 0
    %22 = vsyncpa [#allocation6], 0
    // Predicated region
    $region2: #{tpu_custom_call.1} parent=1 // pred_check
      _
    $region3: #{tpu_custom_call.1} parent=1 // pred_check_branch
      %24 = sbr.rel (0) target = $region5
    $region4: #{tpu_custom_call.1} parent=1 // pred_region
      %s25 = smul.u32 0, 8
      %s26 = sld [smem:[#allocation3 + %s25]]
      %s28 = ssub.s32 16, 16
      %29 = vsyncadd [#allocation5], %s28
      %s30 = smul.addr %s26, 16
      %s31 = scalar_lea.hbm %s1, %s30
      %s33 = sshll.u32 [#allocation4], 4
      %s34 = int_to_ptr.vmem [resolvable:$true] %s33
      %36 = dma.hbm_to_vmem [thread:$0]  %s31, 16, %s34, [#allocation5]
    $region5: #{tpu_custom_call.1} parent=1 // pred_fallthru
      _
    // Predicated region
    $region6: #{tpu_custom_call.1} parent=1 // pred_check
      _
    $region7: #{tpu_custom_call.1} parent=1 // pred_check_branch
      %38 = sbr.rel (0) target = $region9
    $region8: #{tpu_custom_call.1} parent=1 // pred_region
      %s39 = smul.u32 0, 8
      %s40 = sadd.s32 %s39, 1
      %s41 = sld [smem:[#allocation3 + %s40]]
      %s43 = ssub.s32 16, 16
      %44 = vsyncadd [#allocation8], %s43
      %s45 = smul.addr %s41, 16
      %s46 = scalar_lea.hbm %s2, %s45
      %s48 = sshll.u32 [#allocation7], 4
      %s49 = int_to_ptr.vmem [resolvable:$true] %s48
      %51 = dma.hbm_to_vmem [thread:$0]  %s46, 16, %s49, [#allocation8]
    $region9: #{tpu_custom_call.1} parent=1 // pred_fallthru
      _
    // Predicated region
    $region10: #{tpu_custom_call.1} parent=1 // pred_check
      _
    $region11: #{tpu_custom_call.1} parent=1 // pred_check_branch
      %53 = sbr.rel (0) target = $region13
    $region12: #{tpu_custom_call.1} parent=1 // pred_region
      %s54 = smul.u32 0, 8
      %s55 = sadd.s32 %s54, 2
      %s56 = sld [smem:[#allocation3 + %s55]]
      %s58 = ssub.s32 16, 16
      %59 = vsyncadd [#allocation8], %s58
      %s60 = smul.addr %s56, 16
      %s61 = scalar_lea.hbm %s3, %s60
      %s63 = sshll.u32 [#allocation9], 4
      %s64 = int_to_ptr.vmem [resolvable:$true] %s63
      %66 = dma.hbm_to_vmem [thread:$0]  %s61, 16, %s64, [#allocation8]
    $region13: #{tpu_custom_call.1} parent=1 // pred_fallthru
      _
    // Predicated region
    $region14: #{tpu_custom_call.1} parent=1 // pred_check
      _
    $region15: #{tpu_custom_call.1} parent=1 // pred_check_branch
      %68 = sbr.rel (0) target = $region17
    $region16: #{tpu_custom_call.1} parent=1 // pred_region
      %s69 = smul.u32 0, 8
      %s70 = sadd.s32 %s69, 3
      %s71 = sld [smem:[#allocation3 + %s70]]
      %s73 = ssub.s32 16, 16
      %74 = vsyncadd [#allocation11], %s73
      %s75 = smul.addr %s71, 16
      %s76 = scalar_lea.hbm %s4, %s75
      %s78 = sshll.u32 [#allocation10], 4
      %s79 = int_to_ptr.vmem [resolvable:$true] %s78
      %81 = dma.hbm_to_vmem [thread:$0]  %s76, 16, %s79, [#allocation11]
    $region17: #{tpu_custom_call.1} parent=1 // pred_fallthru
      _
    // Predicated region
    $region18: #{tpu_custom_call.1} parent=1 // pred_check
      _
    $region19: #{tpu_custom_call.1} parent=1 // pred_check_branch
      %83 = sbr.rel (0) target = $region21
    $region20: #{tpu_custom_call.1} parent=1 // pred_region
      %s84 = smul.u32 0, 8
      %s85 = sadd.s32 %s84, 4
      %s86 = sld [smem:[#allocation3 + %s85]]
      %p87 = scmp.lt.s32.totalorder %s86, 15
      %s88 = scalar_select %p87, %s86, 15
      %s89 = scalar_lea.vmem %s5, %s88
      %s90 = smul.u32 0, 8
      %s91 = sadd.s32 %s90, 4
      %s92 = sld [smem:[#allocation3 + %s91]]
    $region21: #{tpu_custom_call.1} parent=1 // pred_fallthru
      _
    // Predicated region
    $region22: #{tpu_custom_call.1} parent=1 // pred_check
      _
    $region23: #{tpu_custom_call.1} parent=1 // pred_check_branch
      %94 = sbr.rel (0) target = $region25
    $region24: #{tpu_custom_call.1} parent=1 // pred_region
      %s95 = smul.u32 0, 8
      %s96 = sadd.s32 %s95, 5
      %s97 = sld [smem:[#allocation3 + %s96]]
      %s99 = ssub.s32 16, 16
      %100 = vsyncadd [#allocation11], %s99
      %s101 = smul.addr %s97, 16
      %s102 = scalar_lea.hbm %s6, %s101
      %s104 = sshll.u32 [#allocation12], 4
      %s105 = int_to_ptr.vmem [resolvable:$true] %s104
      %107 = dma.hbm_to_vmem [thread:$0]  %s102, 16, %s105, [#allocation11]
    $region25: #{tpu_custom_call.1} parent=1 // pred_fallthru
      _
    // Predicated region
    $region26: #{tpu_custom_call.1} parent=1 // pred_check
      _
    $region27: #{tpu_custom_call.1} parent=1 // pred_check_branch
      %109 = sbr.rel (0) target = $region29
    $region28: #{tpu_custom_call.1} parent=1 // pred_region
      %s110 = smul.u32 0, 8
      %s111 = sadd.s32 %s110, 6
      %s112 = sld [smem:[#allocation3 + %s111]]
      %s114 = ssub.s32 16, 16
      %115 = vsyncadd [#allocation14], %s114
      %s116 = smul.addr %s112, 16
      %s117 = scalar_lea.hbm %s7, %s116
      %s119 = sshll.u32 [#allocation13], 4
      %s120 = int_to_ptr.vmem [resolvable:$true] %s119
      %122 = dma.hbm_to_vmem [thread:$0]  %s117, 16, %s120, [#allocation14]
    $region29: #{tpu_custom_call.1} parent=1 // pred_fallthru
      _
    // Predicated region
    $region30: #{tpu_custom_call.1} parent=1 // pred_check
      _
    $region31: #{tpu_custom_call.1} parent=1 // pred_check_branch
      %124 = sbr.rel (0) target = $region33
    $region32: #{tpu_custom_call.1} parent=1 // pred_region
      %s125 = smul.u32 0, 8
      %s126 = sadd.s32 %s125, 7
      %s127 = sld [smem:[#allocation3 + %s126]]
      %s129 = ssub.s32 16, 16
      %130 = vsyncadd [#allocation14], %s129
      %s131 = smul.addr %s127, 16
      %s132 = scalar_lea.hbm %s8, %s131
      %s134 = sshll.u32 [#allocation15], 4
      %s135 = int_to_ptr.vmem [resolvable:$true] %s134
      %137 = dma.hbm_to_vmem [thread:$0]  %s132, 16, %s135, [#allocation14]
    $region33: #{tpu_custom_call.1} parent=1 // pred_fallthru
      _
    // Predicated region
    $region34: #{tpu_custom_call.1} parent=1 // pred_check
      _
    $region35: #{tpu_custom_call.1} parent=1 // pred_check_branch
      %139 = sbr.rel (0) target = $region37
    $region36: #{tpu_custom_call.1} parent=1 // pred_region
      %140 = dma.done [#allocation5], 16
    $region37: #{tpu_custom_call.1} parent=1 // pred_fallthru
      _
    // Predicated region
    $region38: #{tpu_custom_call.1} parent=1 // pred_check
      _
    $region39: #{tpu_custom_call.1} parent=1 // pred_check_branch
      %142 = sbr.rel (0) target = $region41
    $region40: #{tpu_custom_call.1} parent=1 // pred_region
      %143 = dma.done [#allocation8], 16
    $region41: #{tpu_custom_call.1} parent=1 // pred_fallthru
      _
    // Predicated region
    $region42: #{tpu_custom_call.1} parent=1 // pred_check
      _
    $region43: #{tpu_custom_call.1} parent=1 // pred_check_branch
      %145 = sbr.rel (0) target = $region45
    $region44: #{tpu_custom_call.1} parent=1 // pred_region
      %146 = dma.done [#allocation8], 16
    $region45: #{tpu_custom_call.1} parent=1 // pred_fallthru
      _
    // Predicated region
    $region46: #{tpu_custom_call.1} parent=1 // pred_check
      _
    $region47: #{tpu_custom_call.1} parent=1 // pred_check_branch
      %148 = sbr.rel (0) target = $region49
    $region48: #{tpu_custom_call.1} parent=1 // pred_region
      %149 = dma.done [#allocation11], 16
    $region49: #{tpu_custom_call.1} parent=1 // pred_fallthru
      _
    // Predicated region
    $region50: #{tpu_custom_call.1} parent=1 // pred_check
      _
    $region51: #{tpu_custom_call.1} parent=1 // pred_check_branch
      %151 = sbr.rel (0) target = $region53
    $region52: #{tpu_custom_call.1} parent=1 // pred_region
      %152 = dma.done [#allocation11], 16
    $region53: #{tpu_custom_call.1} parent=1 // pred_fallthru
      _
    // Predicated region
    $region54: #{tpu_custom_call.1} parent=1 // pred_check
      _
    $region55: #{tpu_custom_call.1} parent=1 // pred_check_branch
      %154 = sbr.rel (0) target = $region57
    $region56: #{tpu_custom_call.1} parent=1 // pred_region
      %155 = dma.done [#allocation14], 16
    $region57: #{tpu_custom_call.1} parent=1 // pred_fallthru
      _
    // Predicated region
    $region58: #{tpu_custom_call.1} parent=1 // pred_check
      _
    $region59: #{tpu_custom_call.1} parent=1 // pred_check_branch
      %157 = sbr.rel (0) target = $region61
    $region60: #{tpu_custom_call.1} parent=1 // pred_region
      %158 = dma.done [#allocation14], 16
    $region61: #{tpu_custom_call.1} parent=1 // pred_fallthru
      _
    %s159 = smul.u32 0, 8
    %s160 = sadd.s32 %s159, 4
    %s161 = sld [smem:[#allocation3 + %s160]]
    %p162 = scmp.lt.s32.totalorder %s161, 15
    %s163 = scalar_select %p162, %s161, 15
    %s164 = scalar_lea.vmem %s5, %s163
    %s165 = smul.u32 0, 8
    %s166 = sld [smem:[#allocation3 + %s165]]
    %s167 = smul.u32 0, 8
    %s168 = sadd.s32 %s167, 1
    %s169 = sld [smem:[#allocation3 + %s168]]
    %s170 = smul.u32 0, 8
    %s171 = sadd.s32 %s170, 2
    %s172 = sld [smem:[#allocation3 + %s171]]
    %s173 = smul.u32 0, 8
    %s174 = sadd.s32 %s173, 3
    %s175 = sld [smem:[#allocation3 + %s174]]
    %s176 = smul.u32 0, 8
    %s177 = sadd.s32 %s176, 4
    %s178 = sld [smem:[#allocation3 + %s177]]
    %p179 = scmp.lt.s32.totalorder %s178, 15
    %s180 = scalar_select %p179, %s178, 15
    %s181 = scalar_lea.vmem %s5, %s180
    %s182 = smul.u32 0, 8
    %s183 = sadd.s32 %s182, 4
    %s184 = sld [smem:[#allocation3 + %s183]]
    %s185 = smul.u32 0, 8
    %s186 = sadd.s32 %s185, 5
    %s187 = sld [smem:[#allocation3 + %s186]]
    %s188 = smul.u32 0, 8
    %s189 = sadd.s32 %s188, 6
    %s190 = sld [smem:[#allocation3 + %s189]]
    %s191 = smul.u32 0, 8
    %s192 = sadd.s32 %s191, 7
    %s193 = sld [smem:[#allocation3 + %s192]]
    %v194 = vld [vmem:[#allocation4] sm:$0x1]
    %vm195 = vcmask 253952
    %196 = vst.msk [vmem:[#allocation16] sm:$0x1] %vm195, %v194
    %v197 = vld [vmem:[#allocation7] sm:$0x1]
    %198 = vst.msk [vmem:[#allocation16 + $0x1] sm:$0x1] %vm195, %v197
    %v199 = vld [vmem:[#allocation9] sm:$0x1]
    %200 = vst.msk [vmem:[#allocation16 + $0x2] sm:$0x1] %vm195, %v199
    %v201 = vld [vmem:[#allocation10] sm:$0x1]
    %202 = vst.msk [vmem:[#allocation16 + $0x3] sm:$0x1] %vm195, %v201
    %v203 = vld [vmem:[%s181] sm:$0x1]
    %204 = vst.msk [vmem:[#allocation16 + $0x4] sm:$0x1] %vm195, %v203
    %v205 = vld [vmem:[#allocation12] sm:$0x1]
    %206 = vst.msk [vmem:[#allocation16 + $0x5] sm:$0x1] %vm195, %v205
    %v207 = vld [vmem:[#allocation13] sm:$0x1]
    %208 = vst.msk [vmem:[#allocation16 + $0x6] sm:$0x1] %vm195, %v207
    %v209 = vld [vmem:[#allocation15] sm:$0x1]
    %210 = vst.msk [vmem:[#allocation16 + $0x7] sm:$0x1] %vm195, %v209
    // Predicated region
    $region62: #{tpu_custom_call.1} parent=1 // pred_check
      _
    $region63: #{tpu_custom_call.1} parent=1 // pred_check_branch
      %212 = sbr.rel (0) target = $region65
    $region64: #{tpu_custom_call.1} parent=1 // pred_region
      %s214 = ssub.s32 128, 128
      %215 = vsyncadd [#allocation6], %s214
      %s217 = sshll.u32 [#allocation16], 4
      %s218 = int_to_ptr.vmem [resolvable:$true] %s217
      %220 = dma.vmem_to_hbm [thread:$0]  %s218, 128, %s9, [#allocation6]
    $region65: #{tpu_custom_call.1} parent=1 // pred_fallthru
      _
    // Predicated region
    $region66: #{tpu_custom_call.1} parent=1 // pred_check
      _
    $region67: #{tpu_custom_call.1} parent=1 // pred_check_branch
      %222 = sbr.rel (0) target = $region69
    $region68: #{tpu_custom_call.1} parent=1 // pred_region
      %223 = dma.done [#allocation6], 128
    $region69: #{tpu_custom_call.1} parent=1 // pred_fallthru
      _
    %224 = vsyncpa [#allocation5], 1
    %225 = vsyncpa [#allocation8], 1
    %226 = vsyncpa [#allocation11], 1
    %227 = vsyncpa [#allocation14], 1
    %228 = vsyncpa [#allocation6], 1

</llo_original>
